<compile_context>
chip_gen: v5e
topology: v5e:2x2
jax: 0.10.0
libtpu: 0.0.40
codegen_flags: <defaults>
</compile_context>

<pallas_src>
import functools

import jax
import jax.numpy as jnp
from jax.experimental import pallas as pl
from jax.experimental.pallas import tpu as pltpu

INPUT_DIM = 14
K_PAD = 16          # layer-1 K padded to a sublane-aligned size (zero-filled -> exact)
HIDDEN = 128
NEG_SLOPE = 0.01    # F.leaky_relu default negative_slope
TB_MAX = 2048       # max batch-tile rows; ~2.2 MB of VMEM per step, far under scoped limits


def _leaky_relu(x):
    # equivalent to leaky_relu for 0 < slope < 1, cheaper than where(cmp, ., .)
    return jnp.maximum(x, NEG_SLOPE * x)


def mlp_kernel(x_ref,
               w1_ref, b1_ref,
               w2_ref, b2_ref,
               w3_ref, b3_ref,
               w4_ref, b4_ref,
               w5_ref, b5_ref,
               o_ref):
    # Layer 1: bf16 (TB, 16) @ bf16 (16, 128) -> f32 accumulator, f32 bias.
    h = jnp.dot(x_ref[...], w1_ref[...],
                preferred_element_type=jnp.float32) + b1_ref[...]
    h = _leaky_relu(h)
    # Layers 2..5: cast activations back to bf16 so every matmul runs at bf16 MXU rate.
    for w_ref, b_ref in ((w2_ref, b2_ref), (w3_ref, b3_ref),
                         (w4_ref, b4_ref), (w5_ref, b5_ref)):
        h = jnp.dot(h.astype(jnp.bfloat16), w_ref[...],
                    preferred_element_type=jnp.float32) + b_ref[...]
        h = _leaky_relu(h)
    o_ref[...] = h.astype(o_ref.dtype)


def _round_up(n, m):
    return ((n + m - 1) // m) * m


def _choose_tiling(B):
    """Balanced batch tiles: TB <= TB_MAX, >= 2 tiles once B >= 1024 (v7x megacore)."""
    B8 = _round_up(max(B, 1), 8)
    n_tiles = pl.cdiv(B8, TB_MAX)
    if B8 >= 1024:
        n_tiles = max(n_tiles, 2)   # keep both v7x TensorCores busy; harmless on v5e/v6e
    TB = _round_up(pl.cdiv(B8, n_tiles), 8)
    return TB, n_tiles


@functools.partial(jax.jit, static_argnames=("out_dtype",))
def vitalsign_feature_mel_thickness(x, params, out_dtype=jnp.float32):
    """x: (B, 14) float32. params: list of 5 (W_t, b) with W_t (in, out), b (1, out)."""
    B = x.shape[0]
    TB, n_tiles = _choose_tiling(B)
    B_pad = TB * n_tiles

    # Single fused cast+pad of x: feature axis 14 -> 16 (zero columns, numerically free)
    # and batch axis B -> B_pad (balanced tiles, at most a few extra rows of padding).
    x_p = jnp.pad(x.astype(jnp.bfloat16),
                  ((0, B_pad - B), (0, K_PAD - INPUT_DIM)))

    flat = []
    in_specs = [pl.BlockSpec((TB, K_PAD), lambda i: (i, 0))]
    for li, (w_t, b) in enumerate(params):
        if li == 0:
            w_p = jnp.pad(w_t, ((0, K_PAD - INPUT_DIM), (0, 0)))   # zero rows: exact
        else:
            w_p = w_t
        flat.append(w_p.astype(jnp.bfloat16))   # bf16 weights: bf16 MXU rate, half the DMA
        flat.append(b.astype(jnp.float32))      # f32 bias added to the f32 accumulator
        k_in = K_PAD if li == 0 else HIDDEN
        in_specs.append(pl.BlockSpec((k_in, HIDDEN), lambda i: (0, 0)))   # weight: resident
        in_specs.append(pl.BlockSpec((1, HIDDEN), lambda i: (0, 0)))      # bias:   resident

    out = pl.pallas_call(
        mlp_kernel,
        out_shape=jax.ShapeDtypeStruct((B_pad, HIDDEN), out_dtype),
        grid=(n_tiles,),
        in_specs=in_specs,
        out_specs=pl.BlockSpec((TB, HIDDEN), lambda i: (i, 0)),
        compiler_params=pltpu.CompilerParams(
            dimension_semantics=("parallel",)),
    )(x_p, *flat)
    return out[:B]


def init_params(key):
    """PyTorch-style (uniform +-1/sqrt(fan_in)) init for the 5 Linear layers."""
    dims = [(INPUT_DIM, HIDDEN)] + [(HIDDEN, HIDDEN)] * 4
    params = []
    for (fan_in, fan_out) in dims:
        key, kw, kb = jax.random.split(key, 3)
        bound = 1.0 / jnp.sqrt(jnp.float32(fan_in))
        # Stored as (in, out) = W^T relative to PyTorch's (out, in) layout.
        w_t = jax.random.uniform(kw, (fan_in, fan_out), jnp.float32, -bound, bound)
        b = jax.random.uniform(kb, (1, fan_out), jnp.float32, -bound, bound)
        params.append((w_t, b))
    return params


def reference_forward(x, params):
    """Precision-matched reference: bf16 operands, f32 accumulate, f32 bias/activation."""
    h = x.astype(jnp.bfloat16)
    out = None
    for w_t, b in params:
        acc = jnp.dot(h, w_t.astype(jnp.bfloat16),
                      preferred_element_type=jnp.float32) + b.astype(jnp.float32)
        acc = jnp.maximum(acc, NEG_SLOPE * acc)
        out = acc
        h = acc.astype(jnp.bfloat16)
    return out


if __name__ == "__main__":
    key = jax.random.PRNGKey(0)
    key, kx, kx2 = jax.random.split(key, 3)
    params = init_params(key)

    # Small batch consistent with the module's (B, 14) input.
    B = 8
    x = jax.random.normal(kx, (B, INPUT_DIM), jnp.float32)
    out = jax.block_until_ready(vitalsign_feature_mel_thickness(x, params))
    ref = reference_forward(x, params)
    assert out.shape == (B, HIDDEN), out.shape
    assert jnp.allclose(out, ref, atol=1e-2, rtol=1e-2), "mismatch vs reference (B=8)"

    # Exercise the batch-padding / ragged-batch path (B not a multiple of 8).
    B2 = 20
    x2 = jax.random.normal(kx2, (B2, INPUT_DIM), jnp.float32)
    out2 = jax.block_until_ready(vitalsign_feature_mel_thickness(x2, params))
    ref2 = reference_forward(x2, params)
    assert out2.shape == (B2, HIDDEN), out2.shape
    assert jnp.allclose(out2, ref2, atol=1e-2, rtol=1e-2), "mismatch vs reference (B=20)"

    print("KERNEL_OK")
</pallas_src>

<mosaic_0001>
module attributes {stable_mosaic.version = 11 : i64} {
  func.func @mlp_kernel(%arg0: i32, %arg1: memref<8x16xbf16, #tpu.memory_space<vmem>>, %arg2: memref<16x128xbf16, #tpu.memory_space<vmem>>, %arg3: memref<1x128xf32, #tpu.memory_space<vmem>>, %arg4: memref<128x128xbf16, #tpu.memory_space<vmem>>, %arg5: memref<1x128xf32, #tpu.memory_space<vmem>>, %arg6: memref<128x128xbf16, #tpu.memory_space<vmem>>, %arg7: memref<1x128xf32, #tpu.memory_space<vmem>>, %arg8: memref<128x128xbf16, #tpu.memory_space<vmem>>, %arg9: memref<1x128xf32, #tpu.memory_space<vmem>>, %arg10: memref<128x128xbf16, #tpu.memory_space<vmem>>, %arg11: memref<1x128xf32, #tpu.memory_space<vmem>>, %arg12: memref<8x128xf32, #tpu.memory_space<vmem>>) attributes {dimension_semantics = [#tpu.dimension_semantics<parallel>], iteration_bounds = array<i64: 1>, scalar_prefetch = 0 : i64, scratch_operands = 0 : i64, tpu.core_type = #tpu.core_type<tc>, window_params = [{transform_indices = @transform_0, window_bounds = array<i64: 8, 16>}, {pipeline_mode = #tpu.pipeline_mode<synchronous>, transform_indices = @transform_1, window_bounds = array<i64: 16, 128>}, {pipeline_mode = #tpu.pipeline_mode<synchronous>, transform_indices = @transform_2, window_bounds = array<i64: 1, 128>}, {pipeline_mode = #tpu.pipeline_mode<synchronous>, transform_indices = @transform_3, window_bounds = array<i64: 128, 128>}, {pipeline_mode = #tpu.pipeline_mode<synchronous>, transform_indices = @transform_4, window_bounds = array<i64: 1, 128>}, {pipeline_mode = #tpu.pipeline_mode<synchronous>, transform_indices = @transform_5, window_bounds = array<i64: 128, 128>}, {pipeline_mode = #tpu.pipeline_mode<synchronous>, transform_indices = @transform_6, window_bounds = array<i64: 1, 128>}, {pipeline_mode = #tpu.pipeline_mode<synchronous>, transform_indices = @transform_7, window_bounds = array<i64: 128, 128>}, {pipeline_mode = #tpu.pipeline_mode<synchronous>, transform_indices = @transform_8, window_bounds = array<i64: 1, 128>}, {pipeline_mode = #tpu.pipeline_mode<synchronous>, transform_indices = @transform_9, window_bounds = array<i64: 128, 128>}, {pipeline_mode = #tpu.pipeline_mode<synchronous>, transform_indices = @transform_10, window_bounds = array<i64: 1, 128>}, {transform_indices = @transform_11, window_bounds = array<i64: 8, 128>}]} {
    %c0 = arith.constant 0 : index
    %c0_0 = arith.constant 0 : index
    %0 = vector.load %arg1[%c0, %c0_0] : memref<8x16xbf16, #tpu.memory_space<vmem>>, vector<8x16xbf16>
    %c0_1 = arith.constant 0 : index
    %c0_2 = arith.constant 0 : index
    %1 = vector.load %arg2[%c0_1, %c0_2] : memref<16x128xbf16, #tpu.memory_space<vmem>>, vector<16x128xbf16>
    %cst = arith.constant dense<0.000000e+00> : vector<8x128xf32>
    %2 = tpu.matmul %0, %1, %cst {dimension_numbers = #tpu.dot_dimension_numbers<[1], [0], [0], [1], [0, 0, 1, 1], [], []>} : vector<8x16xbf16>, vector<16x128xbf16>, vector<8x128xf32> -> vector<8x128xf32>
    %c0_3 = arith.constant 0 : index
    %c0_4 = arith.constant 0 : index
    %3 = vector.load %arg3[%c0_3, %c0_4] : memref<1x128xf32, #tpu.memory_space<vmem>>, vector<1x128xf32>
    %4 = vector.broadcast %3 : vector<1x128xf32> to vector<8x128xf32>
    %5 = arith.addf %2, %4 : vector<8x128xf32>
    %cst_5 = arith.constant 0.00999999977 : f32
    %6 = vector.broadcast %cst_5 : f32 to vector<8x128xf32>
    %7 = arith.mulf %6, %5 : vector<8x128xf32>
    %8 = arith.maximumf %5, %7 : vector<8x128xf32>
    %9 = arith.truncf %8 : vector<8x128xf32> to vector<8x128xbf16>
    %c0_6 = arith.constant 0 : index
    %c0_7 = arith.constant 0 : index
    %10 = vector.load %arg4[%c0_6, %c0_7] : memref<128x128xbf16, #tpu.memory_space<vmem>>, vector<128x128xbf16>
    %cst_8 = arith.constant dense<0.000000e+00> : vector<8x128xf32>
    %11 = tpu.matmul %9, %10, %cst_8 {dimension_numbers = #tpu.dot_dimension_numbers<[1], [0], [0], [1], [0, 0, 1, 1], [], []>} : vector<8x128xbf16>, vector<128x128xbf16>, vector<8x128xf32> -> vector<8x128xf32>
    %c0_9 = arith.constant 0 : index
    %c0_10 = arith.constant 0 : index
    %12 = vector.load %arg5[%c0_9, %c0_10] : memref<1x128xf32, #tpu.memory_space<vmem>>, vector<1x128xf32>
    %13 = vector.broadcast %12 : vector<1x128xf32> to vector<8x128xf32>
    %14 = arith.addf %11, %13 : vector<8x128xf32>
    %cst_11 = arith.constant 0.00999999977 : f32
    %15 = vector.broadcast %cst_11 : f32 to vector<8x128xf32>
    %16 = arith.mulf %15, %14 : vector<8x128xf32>
    %17 = arith.maximumf %14, %16 : vector<8x128xf32>
    %18 = arith.truncf %17 : vector<8x128xf32> to vector<8x128xbf16>
    %c0_12 = arith.constant 0 : index
    %c0_13 = arith.constant 0 : index
    %19 = vector.load %arg6[%c0_12, %c0_13] : memref<128x128xbf16, #tpu.memory_space<vmem>>, vector<128x128xbf16>
    %cst_14 = arith.constant dense<0.000000e+00> : vector<8x128xf32>
    %20 = tpu.matmul %18, %19, %cst_14 {dimension_numbers = #tpu.dot_dimension_numbers<[1], [0], [0], [1], [0, 0, 1, 1], [], []>} : vector<8x128xbf16>, vector<128x128xbf16>, vector<8x128xf32> -> vector<8x128xf32>
    %c0_15 = arith.constant 0 : index
    %c0_16 = arith.constant 0 : index
    %21 = vector.load %arg7[%c0_15, %c0_16] : memref<1x128xf32, #tpu.memory_space<vmem>>, vector<1x128xf32>
    %22 = vector.broadcast %21 : vector<1x128xf32> to vector<8x128xf32>
    %23 = arith.addf %20, %22 : vector<8x128xf32>
    %cst_17 = arith.constant 0.00999999977 : f32
    %24 = vector.broadcast %cst_17 : f32 to vector<8x128xf32>
    %25 = arith.mulf %24, %23 : vector<8x128xf32>
    %26 = arith.maximumf %23, %25 : vector<8x128xf32>
    %27 = arith.truncf %26 : vector<8x128xf32> to vector<8x128xbf16>
    %c0_18 = arith.constant 0 : index
    %c0_19 = arith.constant 0 : index
    %28 = vector.load %arg8[%c0_18, %c0_19] : memref<128x128xbf16, #tpu.memory_space<vmem>>, vector<128x128xbf16>
    %cst_20 = arith.constant dense<0.000000e+00> : vector<8x128xf32>
    %29 = tpu.matmul %27, %28, %cst_20 {dimension_numbers = #tpu.dot_dimension_numbers<[1], [0], [0], [1], [0, 0, 1, 1], [], []>} : vector<8x128xbf16>, vector<128x128xbf16>, vector<8x128xf32> -> vector<8x128xf32>
    %c0_21 = arith.constant 0 : index
    %c0_22 = arith.constant 0 : index
    %30 = vector.load %arg9[%c0_21, %c0_22] : memref<1x128xf32, #tpu.memory_space<vmem>>, vector<1x128xf32>
    %31 = vector.broadcast %30 : vector<1x128xf32> to vector<8x128xf32>
    %32 = arith.addf %29, %31 : vector<8x128xf32>
    %cst_23 = arith.constant 0.00999999977 : f32
    %33 = vector.broadcast %cst_23 : f32 to vector<8x128xf32>
    %34 = arith.mulf %33, %32 : vector<8x128xf32>
    %35 = arith.maximumf %32, %34 : vector<8x128xf32>
    %36 = arith.truncf %35 : vector<8x128xf32> to vector<8x128xbf16>
    %c0_24 = arith.constant 0 : index
    %c0_25 = arith.constant 0 : index
    %37 = vector.load %arg10[%c0_24, %c0_25] : memref<128x128xbf16, #tpu.memory_space<vmem>>, vector<128x128xbf16>
    %cst_26 = arith.constant dense<0.000000e+00> : vector<8x128xf32>
    %38 = tpu.matmul %36, %37, %cst_26 {dimension_numbers = #tpu.dot_dimension_numbers<[1], [0], [0], [1], [0, 0, 1, 1], [], []>} : vector<8x128xbf16>, vector<128x128xbf16>, vector<8x128xf32> -> vector<8x128xf32>
    %c0_27 = arith.constant 0 : index
    %c0_28 = arith.constant 0 : index
    %39 = vector.load %arg11[%c0_27, %c0_28] : memref<1x128xf32, #tpu.memory_space<vmem>>, vector<1x128xf32>
    %40 = vector.broadcast %39 : vector<1x128xf32> to vector<8x128xf32>
    %41 = arith.addf %38, %40 : vector<8x128xf32>
    %cst_29 = arith.constant 0.00999999977 : f32
    %42 = vector.broadcast %cst_29 : f32 to vector<8x128xf32>
    %43 = arith.mulf %42, %41 : vector<8x128xf32>
    %44 = arith.maximumf %41, %43 : vector<8x128xf32>
    %c0_30 = arith.constant 0 : index
    %c0_31 = arith.constant 0 : index
    %45 = vector.load %arg12[%c0_30, %c0_31] : memref<8x128xf32, #tpu.memory_space<vmem>>, vector<8x128xf32>
    tpu.vector_store %arg12[%c0_30, %c0_31], %44 {strides = array<i32>} : memref<8x128xf32, #tpu.memory_space<vmem>>, vector<8x128xf32>,
    return
  }
  func.func @transform_0(%arg0: i32) -> (i32, i32) {
    %c0_i32 = arith.constant 0 : i32
    %c0_i32_0 = arith.constant 0 : i32
    return %arg0, %c0_i32 : i32, i32
  }
  func.func @transform_1(%arg0: i32) -> (i32, i32) {
    %c0_i32 = arith.constant 0 : i32
    %c0_i32_0 = arith.constant 0 : i32
    %c0_i32_1 = arith.constant 0 : i32
    return %c0_i32, %c0_i32_0 : i32, i32
  }
  func.func @transform_2(%arg0: i32) -> (i32, i32) {
    %c0_i32 = arith.constant 0 : i32
    %c0_i32_0 = arith.constant 0 : i32
    %c0_i32_1 = arith.constant 0 : i32
    return %c0_i32, %c0_i32_0 : i32, i32
  }
  func.func @transform_3(%arg0: i32) -> (i32, i32) {
    %c0_i32 = arith.constant 0 : i32
    %c0_i32_0 = arith.constant 0 : i32
    %c0_i32_1 = arith.constant 0 : i32
    return %c0_i32, %c0_i32_0 : i32, i32
  }
  func.func @transform_4(%arg0: i32) -> (i32, i32) {
    %c0_i32 = arith.constant 0 : i32
    %c0_i32_0 = arith.constant 0 : i32
    %c0_i32_1 = arith.constant 0 : i32
    return %c0_i32, %c0_i32_0 : i32, i32
  }
  func.func @transform_5(%arg0: i32) -> (i32, i32) {
    %c0_i32 = arith.constant 0 : i32
    %c0_i32_0 = arith.constant 0 : i32
    %c0_i32_1 = arith.constant 0 : i32
    return %c0_i32, %c0_i32_0 : i32, i32
  }
  func.func @transform_6(%arg0: i32) -> (i32, i32) {
    %c0_i32 = arith.constant 0 : i32
    %c0_i32_0 = arith.constant 0 : i32
    %c0_i32_1 = arith.constant 0 : i32
    return %c0_i32, %c0_i32_0 : i32, i32
  }
  func.func @transform_7(%arg0: i32) -> (i32, i32) {
    %c0_i32 = arith.constant 0 : i32
    %c0_i32_0 = arith.constant 0 : i32
    %c0_i32_1 = arith.constant 0 : i32
    return %c0_i32, %c0_i32_0 : i32, i32
  }
  func.func @transform_8(%arg0: i32) -> (i32, i32) {
    %c0_i32 = arith.constant 0 : i32
    %c0_i32_0 = arith.constant 0 : i32
    %c0_i32_1 = arith.constant 0 : i32
    return %c0_i32, %c0_i32_0 : i32, i32
  }
  func.func @transform_9(%arg0: i32) -> (i32, i32) {
    %c0_i32 = arith.constant 0 : i32
    %c0_i32_0 = arith.constant 0 : i32
    %c0_i32_1 = arith.constant 0 : i32
    return %c0_i32, %c0_i32_0 : i32, i32
  }
  func.func @transform_10(%arg0: i32) -> (i32, i32) {
    %c0_i32 = arith.constant 0 : i32
    %c0_i32_0 = arith.constant 0 : i32
    %c0_i32_1 = arith.constant 0 : i32
    return %c0_i32, %c0_i32_0 : i32, i32
  }
  func.func @transform_11(%arg0: i32) -> (i32, i32) {
    %c0_i32 = arith.constant 0 : i32
    %c0_i32_0 = arith.constant 0 : i32
    return %arg0, %c0_i32 : i32, i32
  }
}

</mosaic_0001>

<llo_original>
// kernel: vitalsign_feature_mel_thickness.1
$region0: #{vitalsign_feature_mel_thickness.1}
  #allocation0 [shape = 'u32[]', space=smem, size = 0x4, offset = 0x4, fixed_abs, tag = 'smem constant byte address 0x4 - core index']
  #allocation1 [shape = 'u32[72,128]{1,0:T(1,128)}', space=vmem, size = 0x9000, scoped, tag = 'internal scratch']
  %s0 = inlined_call_operand.vmem [shape: bf16[8,16], index: 0, kind: input, shape index: {}]
  %s1 = inlined_call_operand.vmem [shape: bf16[16,128], index: 1, kind: input, shape index: {}]
  %s2 = inlined_call_operand.vmem [shape: f32[1,128], index: 2, kind: input, shape index: {}]
  %s3 = inlined_call_operand.vmem [shape: bf16[128,128], index: 3, kind: input, shape index: {}]
  %s4 = inlined_call_operand.vmem [shape: f32[1,128], index: 4, kind: input, shape index: {}]
  %s5 = inlined_call_operand.vmem [shape: bf16[128,128], index: 5, kind: input, shape index: {}]
  %s6 = inlined_call_operand.vmem [shape: f32[1,128], index: 6, kind: input, shape index: {}]
  %s7 = inlined_call_operand.vmem [shape: bf16[128,128], index: 7, kind: input, shape index: {}]
  %s8 = inlined_call_operand.vmem [shape: f32[1,128], index: 8, kind: input, shape index: {}]
  %s9 = inlined_call_operand.vmem [shape: bf16[128,128], index: 9, kind: input, shape index: {}]
  %s10 = inlined_call_operand.vmem [shape: f32[1,128], index: 10, kind: input, shape index: {}]
  %s11 = inlined_call_operand.hbm [shape: f32[8,128], index: 11, kind: output, shape index: {}]
  %s12 = sld [smem:[#allocation0]]
  $region54: #{vitalsign_feature_mel_thickness.1} parent=0
    _
  %s14 = ssub.s32 1, %s12
  %s15 = scalar_select 0, %s14, %s12
  $region1: #{vitalsign_feature_mel_thickness.1} parent=0
    #allocation2 [shape = 'u8[4096]{0}', space=vmem, size = 0x1000, scoped, tag = 'output window, operand 0, single buffered']
    #allocation3 [shape = 's32[1]{0}', space=sflag, size = 0x4, scoped, tag = 'scoped memory for vitalsign_feature_mel_thickness.1']
    %16 = vsyncpa [#allocation3], 0
    // Predicated region
    $region2: #{vitalsign_feature_mel_thickness.1} parent=1 // pred_check
      _
    $region3: #{vitalsign_feature_mel_thickness.1} parent=1 // pred_check_branch
      %18 = sbr.rel (0) target = $region5
    $region4: #{vitalsign_feature_mel_thickness.1} parent=1 // pred_region
      _
    $region5: #{vitalsign_feature_mel_thickness.1} parent=1 // pred_fallthru
      _
    // Predicated region
    $region6: #{vitalsign_feature_mel_thickness.1} parent=1 // pred_check
      _
    $region7: #{vitalsign_feature_mel_thickness.1} parent=1 // pred_check_branch
      %20 = sbr.rel (0) target = $region9
    $region8: #{vitalsign_feature_mel_thickness.1} parent=1 // pred_region
      _
    $region9: #{vitalsign_feature_mel_thickness.1} parent=1 // pred_fallthru
      _
    // Predicated region
    $region10: #{vitalsign_feature_mel_thickness.1} parent=1 // pred_check
      _
    $region11: #{vitalsign_feature_mel_thickness.1} parent=1 // pred_check_branch
      %22 = sbr.rel (0) target = $region13
    $region12: #{vitalsign_feature_mel_thickness.1} parent=1 // pred_region
      _
    $region13: #{vitalsign_feature_mel_thickness.1} parent=1 // pred_fallthru
      _
    // Predicated region
    $region14: #{vitalsign_feature_mel_thickness.1} parent=1 // pred_check
      _
    $region15: #{vitalsign_feature_mel_thickness.1} parent=1 // pred_check_branch
      %24 = sbr.rel (0) target = $region17
    $region16: #{vitalsign_feature_mel_thickness.1} parent=1 // pred_region
      _
    $region17: #{vitalsign_feature_mel_thickness.1} parent=1 // pred_fallthru
      _
    // Predicated region
    $region18: #{vitalsign_feature_mel_thickness.1} parent=1 // pred_check
      _
    $region19: #{vitalsign_feature_mel_thickness.1} parent=1 // pred_check_branch
      %26 = sbr.rel (0) target = $region21
    $region20: #{vitalsign_feature_mel_thickness.1} parent=1 // pred_region
      _
    $region21: #{vitalsign_feature_mel_thickness.1} parent=1 // pred_fallthru
      _
    // Predicated region
    $region22: #{vitalsign_feature_mel_thickness.1} parent=1 // pred_check
      _
    $region23: #{vitalsign_feature_mel_thickness.1} parent=1 // pred_check_branch
      %28 = sbr.rel (0) target = $region25
    $region24: #{vitalsign_feature_mel_thickness.1} parent=1 // pred_region
      _
    $region25: #{vitalsign_feature_mel_thickness.1} parent=1 // pred_fallthru
      _
    // Predicated region
    $region26: #{vitalsign_feature_mel_thickness.1} parent=1 // pred_check
      _
    $region27: #{vitalsign_feature_mel_thickness.1} parent=1 // pred_check_branch
      %30 = sbr.rel (0) target = $region29
    $region28: #{vitalsign_feature_mel_thickness.1} parent=1 // pred_region
      _
    $region29: #{vitalsign_feature_mel_thickness.1} parent=1 // pred_fallthru
      _
    // Predicated region
    $region30: #{vitalsign_feature_mel_thickness.1} parent=1 // pred_check
      _
    $region31: #{vitalsign_feature_mel_thickness.1} parent=1 // pred_check_branch
      %32 = sbr.rel (0) target = $region33
    $region32: #{vitalsign_feature_mel_thickness.1} parent=1 // pred_region
      _
    $region33: #{vitalsign_feature_mel_thickness.1} parent=1 // pred_fallthru
      _
    // Predicated region
    $region34: #{vitalsign_feature_mel_thickness.1} parent=1 // pred_check
      _
    $region35: #{vitalsign_feature_mel_thickness.1} parent=1 // pred_check_branch
      %34 = sbr.rel (0) target = $region37
    $region36: #{vitalsign_feature_mel_thickness.1} parent=1 // pred_region
      _
    $region37: #{vitalsign_feature_mel_thickness.1} parent=1 // pred_fallthru
      _
    // Predicated region
    $region38: #{vitalsign_feature_mel_thickness.1} parent=1 // pred_check
      _
    $region39: #{vitalsign_feature_mel_thickness.1} parent=1 // pred_check_branch
      %36 = sbr.rel (0) target = $region41
    $region40: #{vitalsign_feature_mel_thickness.1} parent=1 // pred_region
      _
    $region41: #{vitalsign_feature_mel_thickness.1} parent=1 // pred_fallthru
      _
    // Predicated region
    $region42: #{vitalsign_feature_mel_thickness.1} parent=1 // pred_check
      _
    $region43: #{vitalsign_feature_mel_thickness.1} parent=1 // pred_check_branch
      %38 = sbr.rel (0) target = $region45
    $region44: #{vitalsign_feature_mel_thickness.1} parent=1 // pred_region
      _
    $region45: #{vitalsign_feature_mel_thickness.1} parent=1 // pred_fallthru
      _
    %v40 = vld [vmem:[%s0] sm:$0xf]
    %v41 = vld [vmem:[%s1] sm:$0xf]
    %v42 = vld [vmem:[%s1 + $0x4] sm:$0xf]
    %v43 = vld [vmem:[%s2] sm:$0x1]
    %v45 = vperm.slane %v43, 0
    %v49 = vunpack.c.l.b16 %v41
    %v50 = vunpack.c.l.b16 %v42
    %v51 = vpack.c.b16 %v50, %v49
    %vm53 = vcmask 130048
    %v55 = vsel %vm53, %v40, 0
    %57 = vmatpush.bf16.msra.mxu0 0
    %58 = vmatpush.bf16.msra.mxu0 0
    %59 = vmatpush.bf16.msra.mxu0 0
    %60 = vmatpush.bf16.msra.mxu0 0
    %61 = vmatpush.bf16.msra.mxu0 0
    %62 = vmatpush.bf16.msra.mxu0 0
    %63 = vmatpush.bf16.msra.mxu0 0
    %64 = vmatpush.bf16.msra.mxu0 %v51
    %65 = vmatmul.bf16.gmra.mxu0 %v55
    %v66 = vpop.f32.mrf.mxu0
    %v67 = vadd.f32 %v45, %v66
    %v68 = vpop.f32.mrf.mxu0
    %69 = vdwg.mxu0
    %v70 = vmul.f32 %v67, 0.01
    %v71 = vmax.f32 %v67, %v70
    %v72 = vpack.c.bf16 %v71, %v71
    %v73 = vld [vmem:[%s3] sm:$0xf]
    %v74 = vld [vmem:[%s3 + $0x4] sm:$0xf]
    %v75 = vld [vmem:[%s3 + $0x8] sm:$0xf]
    %v76 = vld [vmem:[%s3 + $0xc] sm:$0xf]
    %v77 = vld [vmem:[%s3 + $0x10] sm:$0xf]
    %v78 = vld [vmem:[%s3 + $0x14] sm:$0xf]
    %v79 = vld [vmem:[%s3 + $0x18] sm:$0xf]
    %v80 = vld [vmem:[%s3 + $0x1c] sm:$0xf]
    %v81 = vld [vmem:[%s3 + $0x20] sm:$0xf]
    %v82 = vld [vmem:[%s3 + $0x24] sm:$0xf]
    %v83 = vld [vmem:[%s3 + $0x28] sm:$0xf]
    %v84 = vld [vmem:[%s3 + $0x2c] sm:$0xf]
    %v85 = vld [vmem:[%s3 + $0x30] sm:$0xf]
    %v86 = vld [vmem:[%s3 + $0x34] sm:$0xf]
    %v87 = vld [vmem:[%s3 + $0x38] sm:$0xf]
    %v88 = vld [vmem:[%s3 + $0x3c] sm:$0xf]
    %v89 = vld [vmem:[%s4] sm:$0x1]
    %v91 = vperm.slane %v89, 0
    %v109 = vunpack.c.l.b16 %v73
    %v110 = vunpack.c.l.b16 %v74
    %v111 = vunpack.c.l.b16 %v75
    %v112 = vunpack.c.l.b16 %v76
    %v113 = vunpack.c.l.b16 %v77
    %v114 = vunpack.c.l.b16 %v78
    %v115 = vunpack.c.l.b16 %v79
    %v116 = vunpack.c.l.b16 %v80
    %v117 = vunpack.c.l.b16 %v81
    %v118 = vunpack.c.l.b16 %v82
    %v119 = vunpack.c.l.b16 %v83
    %v120 = vunpack.c.l.b16 %v84
    %v121 = vunpack.c.l.b16 %v85
    %v122 = vunpack.c.l.b16 %v86
    %v123 = vunpack.c.l.b16 %v87
    %v124 = vunpack.c.l.b16 %v88
    %v125 = vpack.c.b16 %v110, %v109
    %v126 = vpack.c.b16 %v112, %v111
    %v127 = vpack.c.b16 %v114, %v113
    %v128 = vpack.c.b16 %v116, %v115
    %v129 = vpack.c.b16 %v118, %v117
    %v130 = vpack.c.b16 %v120, %v119
    %v131 = vpack.c.b16 %v122, %v121
    %v132 = vpack.c.b16 %v124, %v123
    %141 = vmatpush.bf16.msra.mxu0 %v132
    %142 = vmatpush.bf16.msra.mxu0 %v131
    %143 = vmatpush.bf16.msra.mxu0 %v130
    %144 = vmatpush.bf16.msra.mxu0 %v129
    %145 = vmatpush.bf16.msra.mxu0 %v128
    %146 = vmatpush.bf16.msra.mxu0 %v127
    %147 = vmatpush.bf16.msra.mxu0 %v126
    %148 = vmatpush.bf16.msra.mxu0 %v125
    %149 = vmatmul.bf16.gmra.mxu0 %v72
    %v150 = vpop.f32.mrf.mxu0
    %v151 = vadd.f32 %v91, %v150
    %v152 = vpop.f32.mrf.mxu0
    %153 = vdwg.mxu0
    %v154 = vmul.f32 %v151, 0.01
    %v155 = vmax.f32 %v151, %v154
    %v156 = vpack.c.bf16 %v155, %v155
    %v157 = vld [vmem:[%s5] sm:$0xf]
    %v158 = vld [vmem:[%s5 + $0x4] sm:$0xf]
    %v159 = vld [vmem:[%s5 + $0x8] sm:$0xf]
    %v160 = vld [vmem:[%s5 + $0xc] sm:$0xf]
    %v161 = vld [vmem:[%s5 + $0x10] sm:$0xf]
    %v162 = vld [vmem:[%s5 + $0x14] sm:$0xf]
    %v163 = vld [vmem:[%s5 + $0x18] sm:$0xf]
    %v164 = vld [vmem:[%s5 + $0x1c] sm:$0xf]
    %v165 = vld [vmem:[%s5 + $0x20] sm:$0xf]
    %v166 = vld [vmem:[%s5 + $0x24] sm:$0xf]
    %v167 = vld [vmem:[%s5 + $0x28] sm:$0xf]
    %v168 = vld [vmem:[%s5 + $0x2c] sm:$0xf]
    %v169 = vld [vmem:[%s5 + $0x30] sm:$0xf]
    %v170 = vld [vmem:[%s5 + $0x34] sm:$0xf]
    %v171 = vld [vmem:[%s5 + $0x38] sm:$0xf]
    %v172 = vld [vmem:[%s5 + $0x3c] sm:$0xf]
    %v173 = vld [vmem:[%s6] sm:$0x1]
    %v175 = vperm.slane %v173, 0
    %v193 = vunpack.c.l.b16 %v157
    %v194 = vunpack.c.l.b16 %v158
    %v195 = vunpack.c.l.b16 %v159
    %v196 = vunpack.c.l.b16 %v160
    %v197 = vunpack.c.l.b16 %v161
    %v198 = vunpack.c.l.b16 %v162
    %v199 = vunpack.c.l.b16 %v163
    %v200 = vunpack.c.l.b16 %v164
    %v201 = vunpack.c.l.b16 %v165
    %v202 = vunpack.c.l.b16 %v166
    %v203 = vunpack.c.l.b16 %v167
    %v204 = vunpack.c.l.b16 %v168
    %v205 = vunpack.c.l.b16 %v169
    %v206 = vunpack.c.l.b16 %v170
    %v207 = vunpack.c.l.b16 %v171
    %v208 = vunpack.c.l.b16 %v172
    %v209 = vpack.c.b16 %v194, %v193
    %v210 = vpack.c.b16 %v196, %v195
    %v211 = vpack.c.b16 %v198, %v197
    %v212 = vpack.c.b16 %v200, %v199
    %v213 = vpack.c.b16 %v202, %v201
    %v214 = vpack.c.b16 %v204, %v203
    %v215 = vpack.c.b16 %v206, %v205
    %v216 = vpack.c.b16 %v208, %v207
    %225 = vmatpush.bf16.msra.mxu0 %v216
    %226 = vmatpush.bf16.msra.mxu0 %v215
    %227 = vmatpush.bf16.msra.mxu0 %v214
    %228 = vmatpush.bf16.msra.mxu0 %v213
    %229 = vmatpush.bf16.msra.mxu0 %v212
    %230 = vmatpush.bf16.msra.mxu0 %v211
    %231 = vmatpush.bf16.msra.mxu0 %v210
    %232 = vmatpush.bf16.msra.mxu0 %v209
    %233 = vmatmul.bf16.gmra.mxu0 %v156
    %v234 = vpop.f32.mrf.mxu0
    %v235 = vadd.f32 %v175, %v234
    %v236 = vpop.f32.mrf.mxu0
    %237 = vdwg.mxu0
    %v238 = vmul.f32 %v235, 0.01
    %v239 = vmax.f32 %v235, %v238
    %v240 = vpack.c.bf16 %v239, %v239
    %v241 = vld [vmem:[%s7] sm:$0xf]
    %v242 = vld [vmem:[%s7 + $0x4] sm:$0xf]
    %v243 = vld [vmem:[%s7 + $0x8] sm:$0xf]
    %v244 = vld [vmem:[%s7 + $0xc] sm:$0xf]
    %v245 = vld [vmem:[%s7 + $0x10] sm:$0xf]
    %v246 = vld [vmem:[%s7 + $0x14] sm:$0xf]
    %v247 = vld [vmem:[%s7 + $0x18] sm:$0xf]
    %v248 = vld [vmem:[%s7 + $0x1c] sm:$0xf]
    %v249 = vld [vmem:[%s7 + $0x20] sm:$0xf]
    %v250 = vld [vmem:[%s7 + $0x24] sm:$0xf]
    %v251 = vld [vmem:[%s7 + $0x28] sm:$0xf]
    %v252 = vld [vmem:[%s7 + $0x2c] sm:$0xf]
    %v253 = vld [vmem:[%s7 + $0x30] sm:$0xf]
    %v254 = vld [vmem:[%s7 + $0x34] sm:$0xf]
    %v255 = vld [vmem:[%s7 + $0x38] sm:$0xf]
    %v256 = vld [vmem:[%s7 + $0x3c] sm:$0xf]
    %v257 = vld [vmem:[%s8] sm:$0x1]
    %v259 = vperm.slane %v257, 0
    %v277 = vunpack.c.l.b16 %v241
    %v278 = vunpack.c.l.b16 %v242
    %v279 = vunpack.c.l.b16 %v243
    %v280 = vunpack.c.l.b16 %v244
    %v281 = vunpack.c.l.b16 %v245
    %v282 = vunpack.c.l.b16 %v246
    %v283 = vunpack.c.l.b16 %v247
    %v284 = vunpack.c.l.b16 %v248
    %v285 = vunpack.c.l.b16 %v249
    %v286 = vunpack.c.l.b16 %v250
    %v287 = vunpack.c.l.b16 %v251
    %v288 = vunpack.c.l.b16 %v252
    %v289 = vunpack.c.l.b16 %v253
    %v290 = vunpack.c.l.b16 %v254
    %v291 = vunpack.c.l.b16 %v255
    %v292 = vunpack.c.l.b16 %v256
    %v293 = vpack.c.b16 %v278, %v277
    %v294 = vpack.c.b16 %v280, %v279
    %v295 = vpack.c.b16 %v282, %v281
    %v296 = vpack.c.b16 %v284, %v283
    %v297 = vpack.c.b16 %v286, %v285
    %v298 = vpack.c.b16 %v288, %v287
    %v299 = vpack.c.b16 %v290, %v289
    %v300 = vpack.c.b16 %v292, %v291
    %309 = vmatpush.bf16.msra.mxu0 %v300
    %310 = vmatpush.bf16.msra.mxu0 %v299
    %311 = vmatpush.bf16.msra.mxu0 %v298
    %312 = vmatpush.bf16.msra.mxu0 %v297
    %313 = vmatpush.bf16.msra.mxu0 %v296
    %314 = vmatpush.bf16.msra.mxu0 %v295
    %315 = vmatpush.bf16.msra.mxu0 %v294
    %316 = vmatpush.bf16.msra.mxu0 %v293
    %317 = vmatmul.bf16.gmra.mxu0 %v240
    %v318 = vpop.f32.mrf.mxu0
    %v319 = vadd.f32 %v259, %v318
    %v320 = vpop.f32.mrf.mxu0
    %321 = vdwg.mxu0
    %v322 = vmul.f32 %v319, 0.01
    %v323 = vmax.f32 %v319, %v322
    %v324 = vpack.c.bf16 %v323, %v323
    %v325 = vld [vmem:[%s9] sm:$0xf]
    %v326 = vld [vmem:[%s9 + $0x4] sm:$0xf]
    %v327 = vld [vmem:[%s9 + $0x8] sm:$0xf]
    %v328 = vld [vmem:[%s9 + $0xc] sm:$0xf]
    %v329 = vld [vmem:[%s9 + $0x10] sm:$0xf]
    %v330 = vld [vmem:[%s9 + $0x14] sm:$0xf]
    %v331 = vld [vmem:[%s9 + $0x18] sm:$0xf]
    %v332 = vld [vmem:[%s9 + $0x1c] sm:$0xf]
    %v333 = vld [vmem:[%s9 + $0x20] sm:$0xf]
    %v334 = vld [vmem:[%s9 + $0x24] sm:$0xf]
    %v335 = vld [vmem:[%s9 + $0x28] sm:$0xf]
    %v336 = vld [vmem:[%s9 + $0x2c] sm:$0xf]
    %v337 = vld [vmem:[%s9 + $0x30] sm:$0xf]
    %v338 = vld [vmem:[%s9 + $0x34] sm:$0xf]
    %v339 = vld [vmem:[%s9 + $0x38] sm:$0xf]
    %v340 = vld [vmem:[%s9 + $0x3c] sm:$0xf]
    %v341 = vld [vmem:[%s10] sm:$0x1]
    %v343 = vperm.slane %v341, 0
    %v361 = vunpack.c.l.b16 %v325
    %v362 = vunpack.c.l.b16 %v326
    %v363 = vunpack.c.l.b16 %v327
    %v364 = vunpack.c.l.b16 %v328
    %v365 = vunpack.c.l.b16 %v329
    %v366 = vunpack.c.l.b16 %v330
    %v367 = vunpack.c.l.b16 %v331
    %v368 = vunpack.c.l.b16 %v332
    %v369 = vunpack.c.l.b16 %v333
    %v370 = vunpack.c.l.b16 %v334
    %v371 = vunpack.c.l.b16 %v335
    %v372 = vunpack.c.l.b16 %v336
    %v373 = vunpack.c.l.b16 %v337
    %v374 = vunpack.c.l.b16 %v338
    %v375 = vunpack.c.l.b16 %v339
    %v376 = vunpack.c.l.b16 %v340
    %v377 = vpack.c.b16 %v362, %v361
    %v378 = vpack.c.b16 %v364, %v363
    %v379 = vpack.c.b16 %v366, %v365
    %v380 = vpack.c.b16 %v368, %v367
    %v381 = vpack.c.b16 %v370, %v369
    %v382 = vpack.c.b16 %v372, %v371
    %v383 = vpack.c.b16 %v374, %v373
    %v384 = vpack.c.b16 %v376, %v375
    %393 = vmatpush.bf16.msra.mxu0 %v384
    %394 = vmatpush.bf16.msra.mxu0 %v383
    %395 = vmatpush.bf16.msra.mxu0 %v382
    %396 = vmatpush.bf16.msra.mxu0 %v381
    %397 = vmatpush.bf16.msra.mxu0 %v380
    %398 = vmatpush.bf16.msra.mxu0 %v379
    %399 = vmatpush.bf16.msra.mxu0 %v378
    %400 = vmatpush.bf16.msra.mxu0 %v377
    %401 = vmatmul.bf16.gmra.mxu0 %v324
    %v402 = vpop.f32.mrf.mxu0
    %v403 = vadd.f32 %v343, %v402
    %v404 = vpop.f32.mrf.mxu0
    %405 = vdwg.mxu0
    %v406 = vmul.f32 %v403, 0.01
    %v407 = vmax.f32 %v403, %v406
    %408 = vst [vmem:[#allocation2] sm:$0xff] %v407
    // Predicated region
    $region46: #{vitalsign_feature_mel_thickness.1} parent=1 // pred_check
      _
    $region47: #{vitalsign_feature_mel_thickness.1} parent=1 // pred_check_branch
      %410 = sbr.rel (0) target = $region49
    $region48: #{vitalsign_feature_mel_thickness.1} parent=1 // pred_region
      %412 = vsyncadd [#allocation3], 0
      %s414 = sshll.u32 [#allocation2], 4
      %s415 = int_to_ptr.vmem [resolvable:$true] %s414
      %s416 = sshll.u32 %s11, 4
      %s417 = int_to_ptr.hbm [resolvable:$true] %s416
      %419 = dma.vmem_to_hbm [thread:$0]  %s415, 128, %s417, [#allocation3]
    $region49: #{vitalsign_feature_mel_thickness.1} parent=1 // pred_fallthru
      _
    // Predicated region
    $region50: #{vitalsign_feature_mel_thickness.1} parent=1 // pred_check
      _
    $region51: #{vitalsign_feature_mel_thickness.1} parent=1 // pred_check_branch
      %421 = sbr.rel (0) target = $region53
    $region52: #{vitalsign_feature_mel_thickness.1} parent=1 // pred_region
      %423 = dma.done [#allocation3], 128
    $region53: #{vitalsign_feature_mel_thickness.1} parent=1 // pred_fallthru
      _
    %424 = vsyncpa [#allocation3], 1

</llo_original>
